<compile_context>
chip_gen: v7x
topology: tpu7x:2x2x1
jax: 0.10.0
libtpu: 0.0.40
codegen_flags: <defaults>
</compile_context>

<pallas_src>
import functools

import jax
import jax.numpy as jnp
from jax.experimental import pallas as pl
from jax.experimental.pallas import tpu as pltpu


# ---------------------------------------------------------------------------
# Kernels (activation cast -> MXU dtype happens in-kernel, f32 accumulation)
# ---------------------------------------------------------------------------
def _fused_add_kernel(pc_ref, mat_ref, wpc_ref, wm_ref, b_ref, out_ref):
    # out = pc @ Wpc + mat @ Wm + (b_pc + b_mat)   (bias pre-folded)
    cdt = wpc_ref.dtype
    acc = jnp.dot(pc_ref[...].astype(cdt), wpc_ref[...],
                  preferred_element_type=jnp.float32)
    acc = acc + jnp.dot(mat_ref[...].astype(cdt), wm_ref[...],
                        preferred_element_type=jnp.float32)
    out_ref[...] = (acc + b_ref[...]).astype(out_ref.dtype)


def _fused_sq_cat_kernel(pc_ref, mat_ref, wpc_ref, bpc_ref, wm_ref, bm_ref, out_ref):
    # Lane-dense output slab: out[:, :dt] = pc proj, out[:, dt:] = matrix proj.
    cdt = wpc_ref.dtype
    dt = wpc_ref.shape[1]
    text_pc = jnp.dot(pc_ref[...].astype(cdt), wpc_ref[...],
                      preferred_element_type=jnp.float32) + bpc_ref[...]
    text_mat = jnp.dot(mat_ref[...].astype(cdt), wm_ref[...],
                       preferred_element_type=jnp.float32) + bm_ref[...]
    out_ref[:, :dt] = text_pc.astype(out_ref.dtype)
    out_ref[:, dt:] = text_mat.astype(out_ref.dtype)


# ---------------------------------------------------------------------------
# Tile / VMEM helpers
# ---------------------------------------------------------------------------
_SUBLANE = 16  # bf16-native sublane packing; also fine for f32 blocks


def _round_up(x, m):
    return (x + m - 1) // m * m


@functools.lru_cache(maxsize=1)
def _vmem_capacity_bytes():
    try:
        return int(pltpu.get_tpu_info().vmem_capacity_bytes)
    except Exception:
        return 64 * 1024 * 1024  # conservative fallback (v7x per-TC VMEM)


def _pick_batch_tile(b, row_bytes, budget):
    """Batch tile: aims for >= 4 (even) grid steps so the pipeline has work to
    overlap and the v7x megacore can split the batch axis, sublane-aligned,
    with a double-buffered streaming footprint bounded by `budget`."""
    tb = min(512, _round_up(max(1, pl.cdiv(b, 4)), _SUBLANE))
    while tb > _SUBLANE and 2 * tb * row_bytes > budget:
        tb = _round_up(tb // 2, _SUBLANE)
    tb = max(_SUBLANE, tb)
    if tb >= b:
        return b  # tiny batch: one full-extent step (block dim == array dim)
    return tb


# ---------------------------------------------------------------------------
# Parameter preparation (run ONCE, outside the per-step jitted call path)
# ---------------------------------------------------------------------------
def prepare_params(params, *, fusion="add", compute_dtype=jnp.bfloat16):
    """Cast weights to the MXU operand dtype and pre-fold the bias for 'add'.

    Doing this once avoids a per-call HBM weight conversion pass; the kernel
    then streams half the weight bytes on the bf16 path.
    """
    prepared = {
        "w_pc": params["w_pc"].astype(compute_dtype),
        "w_mat": params["w_mat"].astype(compute_dtype),
        "b_pc": params["b_pc"].astype(jnp.float32).reshape(1, -1),
        "b_mat": params["b_mat"].astype(jnp.float32).reshape(1, -1),
    }
    if fusion == "add":
        prepared["b_sum"] = prepared["b_pc"] + prepared["b_mat"]
    return prepared


# ---------------------------------------------------------------------------
# Wrapper
# ---------------------------------------------------------------------------
@functools.partial(jax.jit, static_argnames=("fusion", "out_dtype"))
def text_pc_matrix_embedding(pc_embeds, matrix_embeds, prepared, *, fusion="add",
                             out_dtype=None):
    """Pallas implementation of TextPCMatrixEmbedding.forward.

    pc_embeds:     [B, pc_embed_dim]        (kept in HBM dtype; cast in-kernel)
    matrix_embeds: [B, matrix_embed_dim]
    prepared: dict from prepare_params() with
        w_pc  [pc_embed_dim, text_embed_dim]   (pre-transposed, compute dtype)
        w_mat [matrix_embed_dim, text_embed_dim]
        b_pc / b_mat [1, text_embed_dim]  (f32), and b_sum for fusion == 'add'
    """
    b, pc_dim = pc_embeds.shape
    mat_dim = matrix_embeds.shape[1]
    dt = prepared["w_pc"].shape[1]
    compute_dtype = prepared["w_pc"].dtype
    out_dtype = pc_embeds.dtype if out_dtype is None else jnp.dtype(out_dtype)

    if fusion == "add":
        out_cols = dt
    elif fusion == "sq_cat":
        out_cols = 2 * dt
    else:
        raise NotImplementedError("error fusion.")

    in_bytes = jnp.dtype(pc_embeds.dtype).itemsize
    out_bytes = jnp.dtype(out_dtype).itemsize
    cmp_bytes = jnp.dtype(compute_dtype).itemsize

    # VMEM budget derived from the actual chip capacity (v7x 64 MiB vs 128 MiB).
    vmem_cap = _vmem_capacity_bytes()
    vmem_limit = int(min(vmem_cap - 8 * 1024 * 1024, vmem_cap * 0.85))
    weight_bytes = (pc_dim + mat_dim) * dt * cmp_bytes + 2 * dt * 4
    row_bytes = (pc_dim + mat_dim) * in_bytes + out_cols * out_bytes
    budget = max(1 << 20, vmem_limit - weight_bytes - 8 * 1024 * 1024)

    tb = _pick_batch_tile(b, row_bytes, budget)
    grid = (pl.cdiv(b, tb),)

    # Activations / outputs stream over the batch grid (double-buffered by the
    # pipeline); weights & biases are constant-index and single-buffered.
    resident = pl.Buffered(1)
    pc_spec = pl.BlockSpec((tb, pc_dim), lambda i: (i, 0))
    mat_spec = pl.BlockSpec((tb, mat_dim), lambda i: (i, 0))
    wpc_spec = pl.BlockSpec((pc_dim, dt), lambda i: (0, 0), pipeline_mode=resident)
    wm_spec = pl.BlockSpec((mat_dim, dt), lambda i: (0, 0), pipeline_mode=resident)
    bias_spec = pl.BlockSpec((1, dt), lambda i: (0, 0), pipeline_mode=resident)
    out_spec = pl.BlockSpec((tb, out_cols), lambda i: (i, 0))

    flops = 2 * b * (pc_dim + mat_dim) * dt
    bytes_accessed = (b * (pc_dim + mat_dim) * in_bytes        # activations in
                      + (pc_dim + mat_dim) * dt * cmp_bytes    # weights
                      + 2 * dt * 4                             # biases
                      + b * out_cols * out_bytes)              # output
    cost = pl.CostEstimate(flops=flops, transcendentals=0,
                           bytes_accessed=bytes_accessed)

    cparams = pltpu.CompilerParams(
        dimension_semantics=("parallel",),     # megacore-shard the batch axis
        vmem_limit_bytes=vmem_limit)

    if fusion == "add":
        return pl.pallas_call(
            _fused_add_kernel,
            out_shape=jax.ShapeDtypeStruct((b, dt), out_dtype),
            grid=grid,
            in_specs=[pc_spec, mat_spec, wpc_spec, wm_spec, bias_spec],
            out_specs=out_spec,
            compiler_params=cparams,
            cost_estimate=cost,
        )(pc_embeds, matrix_embeds, prepared["w_pc"], prepared["w_mat"],
          prepared["b_sum"])

    # fusion == "sq_cat": lane-dense 2-D kernel output, contiguous reshape back.
    out2d = pl.pallas_call(
        _fused_sq_cat_kernel,
        out_shape=jax.ShapeDtypeStruct((b, 2 * dt), out_dtype),
        grid=grid,
        in_specs=[pc_spec, mat_spec, wpc_spec, bias_spec, wm_spec, bias_spec],
        out_specs=out_spec,
        compiler_params=cparams,
        cost_estimate=cost,
    )(pc_embeds, matrix_embeds, prepared["w_pc"], prepared["b_pc"],
      prepared["w_mat"], prepared["b_mat"])
    return out2d.reshape(b, 2, dt)


# ---------------------------------------------------------------------------
# Params / reference / demo
# ---------------------------------------------------------------------------
def init_params(key, pc_embed_dim, matrix_embed_dim, text_embed_dim):
    """Deterministic synthetic parameter init (mirrors nn.Linear shapes)."""
    k1, k2, k3, k4 = jax.random.split(key, 4)
    # nn.Linear weight is [out, in]; we store the transpose [in, out] for x @ W.
    w_pc = jax.random.normal(k1, (pc_embed_dim, text_embed_dim), jnp.float32) * 0.02
    b_pc = jax.random.normal(k2, (1, text_embed_dim), jnp.float32) * 0.02
    w_mat = jax.random.normal(k3, (matrix_embed_dim, text_embed_dim), jnp.float32) * 0.02
    b_mat = jax.random.normal(k4, (1, text_embed_dim), jnp.float32) * 0.02
    return {"w_pc": w_pc, "b_pc": b_pc, "w_mat": w_mat, "b_mat": b_mat}


def _reference(pc_embeds, matrix_embeds, params, fusion, compute_dtype):
    wp = params["w_pc"].astype(compute_dtype)
    wm = params["w_mat"].astype(compute_dtype)
    text_pc = jnp.dot(pc_embeds.astype(compute_dtype), wp,
                      preferred_element_type=jnp.float32) + params["b_pc"]
    text_mat = jnp.dot(matrix_embeds.astype(compute_dtype), wm,
                       preferred_element_type=jnp.float32) + params["b_mat"]
    if fusion == "add":
        return (text_pc + text_mat).astype(pc_embeds.dtype)
    return jnp.concatenate(
        [text_pc[:, None, :], text_mat[:, None, :]], axis=1).astype(pc_embeds.dtype)


if __name__ == "__main__":
    # Small shapes consistent with the module (production: pc=768, matrix=256,
    # text=768; scaled down here).
    PC_DIM = 64
    MAT_DIM = 32
    TEXT_DIM = 128

    key = jax.random.PRNGKey(0)
    k_pc, k_mat, k_params = jax.random.split(key, 3)
    params = init_params(k_params, PC_DIM, MAT_DIM, TEXT_DIM)

    ok = True
    # B=64 -> 4 grid steps; B=56 -> partial trailing batch tile (masked writeback).
    for B in (64, 56):
        pc_embeds = jax.random.normal(k_pc, (B, PC_DIM), jnp.float32)
        matrix_embeds = jax.random.normal(k_mat, (B, MAT_DIM), jnp.float32)
        for fusion in ("add", "sq_cat"):
            for compute_dtype, tol in ((jnp.float32, 1e-5), (jnp.bfloat16, 2e-2)):
                prepared = prepare_params(params, fusion=fusion,
                                          compute_dtype=compute_dtype)
                out = text_pc_matrix_embedding(pc_embeds, matrix_embeds, prepared,
                                               fusion=fusion)
                out = jax.block_until_ready(out)
                ref = _reference(pc_embeds, matrix_embeds, params, fusion,
                                 compute_dtype)
                if out.shape != ref.shape or not jnp.allclose(out, ref,
                                                              atol=tol, rtol=tol):
                    ok = False

    if ok:
        print("KERNEL_OK")
</pallas_src>

<mosaic_0001>
module attributes {stable_mosaic.version = 11 : i64} {
  func.func @_fused_add_kernel(%arg0: i32, %arg1: memref<16x64xf32, #tpu.memory_space<vmem>>, %arg2: memref<16x32xf32, #tpu.memory_space<vmem>>, %arg3: memref<64x128xf32, #tpu.memory_space<vmem>>, %arg4: memref<32x128xf32, #tpu.memory_space<vmem>>, %arg5: memref<1x128xf32, #tpu.memory_space<vmem>>, %arg6: memref<16x128xf32, #tpu.memory_space<vmem>>) attributes {dimension_semantics = [#tpu.dimension_semantics<parallel>], iteration_bounds = array<i64: 4>, scalar_prefetch = 0 : i64, scratch_operands = 0 : i64, tpu.core_type = #tpu.core_type<tc>, window_params = [{transform_indices = @transform_0, window_bounds = array<i64: 16, 64>}, {transform_indices = @transform_1, window_bounds = array<i64: 16, 32>}, {pipeline_mode = #tpu.pipeline_mode<synchronous>, transform_indices = @transform_2, window_bounds = array<i64: 64, 128>}, {pipeline_mode = #tpu.pipeline_mode<synchronous>, transform_indices = @transform_3, window_bounds = array<i64: 32, 128>}, {pipeline_mode = #tpu.pipeline_mode<synchronous>, transform_indices = @transform_4, window_bounds = array<i64: 1, 128>}, {transform_indices = @transform_5, window_bounds = array<i64: 16, 128>}]} {
    %c0 = arith.constant 0 : index
    %c0_0 = arith.constant 0 : index
    %0 = vector.load %arg1[%c0, %c0_0] : memref<16x64xf32, #tpu.memory_space<vmem>>, vector<16x64xf32>
    %c0_1 = arith.constant 0 : index
    %c0_2 = arith.constant 0 : index
    %1 = vector.load %arg3[%c0_1, %c0_2] : memref<64x128xf32, #tpu.memory_space<vmem>>, vector<64x128xf32>
    %cst = arith.constant dense<0.000000e+00> : vector<16x128xf32>
    %2 = tpu.matmul %0, %1, %cst {dimension_numbers = #tpu.dot_dimension_numbers<[1], [0], [0], [1], [0, 0, 1, 1], [], []>} : vector<16x64xf32>, vector<64x128xf32>, vector<16x128xf32> -> vector<16x128xf32>
    %c0_3 = arith.constant 0 : index
    %c0_4 = arith.constant 0 : index
    %3 = vector.load %arg2[%c0_3, %c0_4] : memref<16x32xf32, #tpu.memory_space<vmem>>, vector<16x32xf32>
    %c0_5 = arith.constant 0 : index
    %c0_6 = arith.constant 0 : index
    %4 = vector.load %arg4[%c0_5, %c0_6] : memref<32x128xf32, #tpu.memory_space<vmem>>, vector<32x128xf32>
    %cst_7 = arith.constant dense<0.000000e+00> : vector<16x128xf32>
    %5 = tpu.matmul %3, %4, %cst_7 {dimension_numbers = #tpu.dot_dimension_numbers<[1], [0], [0], [1], [0, 0, 1, 1], [], []>} : vector<16x32xf32>, vector<32x128xf32>, vector<16x128xf32> -> vector<16x128xf32>
    %6 = arith.addf %2, %5 : vector<16x128xf32>
    %c0_8 = arith.constant 0 : index
    %c0_9 = arith.constant 0 : index
    %7 = vector.load %arg5[%c0_8, %c0_9] : memref<1x128xf32, #tpu.memory_space<vmem>>, vector<1x128xf32>
    %8 = vector.broadcast %7 : vector<1x128xf32> to vector<16x128xf32>
    %9 = arith.addf %6, %8 : vector<16x128xf32>
    %c0_10 = arith.constant 0 : index
    %c0_11 = arith.constant 0 : index
    %10 = vector.load %arg6[%c0_10, %c0_11] : memref<16x128xf32, #tpu.memory_space<vmem>>, vector<16x128xf32>
    tpu.vector_store %arg6[%c0_10, %c0_11], %9 {strides = array<i32>} : memref<16x128xf32, #tpu.memory_space<vmem>>, vector<16x128xf32>,
    return
  }
  func.func @transform_0(%arg0: i32) -> (i32, i32) {
    %c0_i32 = arith.constant 0 : i32
    %c0_i32_0 = arith.constant 0 : i32
    return %arg0, %c0_i32 : i32, i32
  }
  func.func @transform_1(%arg0: i32) -> (i32, i32) {
    %c0_i32 = arith.constant 0 : i32
    %c0_i32_0 = arith.constant 0 : i32
    return %arg0, %c0_i32 : i32, i32
  }
  func.func @transform_2(%arg0: i32) -> (i32, i32) {
    %c0_i32 = arith.constant 0 : i32
    %c0_i32_0 = arith.constant 0 : i32
    %c0_i32_1 = arith.constant 0 : i32
    return %c0_i32, %c0_i32_0 : i32, i32
  }
  func.func @transform_3(%arg0: i32) -> (i32, i32) {
    %c0_i32 = arith.constant 0 : i32
    %c0_i32_0 = arith.constant 0 : i32
    %c0_i32_1 = arith.constant 0 : i32
    return %c0_i32, %c0_i32_0 : i32, i32
  }
  func.func @transform_4(%arg0: i32) -> (i32, i32) {
    %c0_i32 = arith.constant 0 : i32
    %c0_i32_0 = arith.constant 0 : i32
    %c0_i32_1 = arith.constant 0 : i32
    return %c0_i32, %c0_i32_0 : i32, i32
  }
  func.func @transform_5(%arg0: i32) -> (i32, i32) {
    %c0_i32 = arith.constant 0 : i32
    %c0_i32_0 = arith.constant 0 : i32
    return %arg0, %c0_i32 : i32, i32
  }
}

</mosaic_0001>

<llo_original>
// kernel: text_pc_matrix_embedding.1
$region0: #{text_pc_matrix_embedding.1}
  #allocation0 [shape = 'u32[]', space=smem, size = 0x4, offset = 0x4, fixed_abs, tag = 'smem constant byte address 0x4 - core index']
  #allocation1 [shape = 'u32[144,128]{1,0:T(1,128)}', space=vmem, size = 0x12000, scoped, tag = 'internal scratch']
  %s0 = inlined_call_operand.vmem [shape: f32[64,64], index: 0, kind: input, shape index: {}]
  %s1 = inlined_call_operand.vmem [shape: f32[64,32], index: 1, kind: input, shape index: {}]
  %s2 = inlined_call_operand.hbm [shape: f32[64,128], index: 2, kind: input, shape index: {}]
  %s3 = inlined_call_operand.vmem [shape: f32[32,128], index: 3, kind: input, shape index: {}]
  %s4 = inlined_call_operand.vmem [shape: f32[1,128], index: 4, kind: input, shape index: {}]
  %s5 = inlined_call_operand.hbm [shape: f32[64,128], index: 5, kind: output, shape index: {}]
  %s6 = sld [smem:[#allocation0]]
  $region57: #{text_pc_matrix_embedding.1} parent=0
    _
  %s8 = ssub.s32 1, %s6
  %s9 = scalar_select 0, %s8, %s6
  $region1: #{text_pc_matrix_embedding.1} parent=0
    #allocation2 [shape = 'u8[32768]{0}', space=vmem, size = 0x8000, scoped, tag = 'input window, operand 2, single buffered']
    #allocation3 [shape = 's32[2]{0}', space=sflag, size = 0x8, scoped, tag = 'scoped memory for text_pc_matrix_embedding.1']
    #allocation4 [shape = 's32[2]{0}', space=sflag, size = 0x8, scoped, tag = 'scoped memory for text_pc_matrix_embedding.1']
    #allocation5 [shape = 'u8[16384]{0}', space=vmem, size = 0x4000, scoped, tag = 'output window, operand 0']
    %10 = vsyncpa [#allocation3], 0
    %11 = vsyncpa [#allocation4], 0
    %s12 = scalar_lea.sflag [#allocation4], 1
    %13 = vsyncpa %s12, 0
    loop: start=0, step=1, limit=6
    $region2: #{text_pc_matrix_embedding.1} parent=1 // loop_pre_header
      _
    $region3: #{text_pc_matrix_embedding.1} parent=1 // loop_header
      %s15 = sphi 0, %s19
      %p16 = scmp.ge.s32.totalorder %s15, 6
      %s25 = sphi 0, %s27
      %s28 = sphi 0, %s25
      %s29 = sphi 0, %s28
      %s45 = sphi 0, %s29
      %s51 = sphi 0, %s53
      %s54 = sphi 0, %s51
      %s55 = sphi 0, %s54
      %s71 = sphi 0, %s55
      %s75 = sphi 0, %s75
      %s77 = sphi 0, %s75
      %s78 = sphi 0, %s77
      %s92 = sphi 0, %s78
      %s96 = sphi 0, %s96
      %s98 = sphi 0, %s96
      %s99 = sphi 0, %s98
      %s113 = sphi 0, %s99
      %s117 = sphi 0, %s117
      %s119 = sphi 0, %s117
      %s120 = sphi 0, %s119
      %s134 = sphi 0, %s120
      %s140 = sphi 0, %s142
      %s143 = sphi 0, %s140
      %s144 = sphi 0, %s143
      %s160 = sphi 0, %s144
    $region4: #{text_pc_matrix_embedding.1} parent=1 // loop_header_branch
      %18 = sbr.rel (%p16) target = $region8
    $region5: #{text_pc_matrix_embedding.1} parent=1 // loop_body
      %s20 = ssub.s32 %s15, 1
      %s21 = ssub.s32 %s15, 2
      %s22 = sadd.s32 %s15, 1
      %s23 = ssub.s32 %s15, %s22
      %p24 = scmp.eq.s32.totalorder %s23, 0
      %s26 = sadd.s32 %s25, 1
      %s27 = scalar_select %p24, %s25, %s26
      %p30 = pneg %p24
      %p31 = scmp.eq.s32.totalorder %s15, 3
      %p32 = por %p30, %p31
      %p33 = scmp.ne.s32.totalorder %s25, %s28
      %p34 = scmp.eq.s32.totalorder %s15, 0
      %p35 = por %p33, %p34
      %p36 = scmp.ne.s32.totalorder %s25, %s28
      %p37 = scmp.eq.s32.totalorder %s20, 3
      %p38 = por %p36, %p37
      %p39 = scmp.ne.s32.totalorder %s28, %s29
      %p40 = scmp.eq.s32.totalorder %s20, 0
      %p41 = por %p39, %p40
      %p42 = scmp.ne.s32.totalorder %s28, %s29
      %p43 = scmp.eq.s32.totalorder %s21, 3
      %p44 = por %p42, %p43
      %p46 = scmp.ne.s32.totalorder %s29, %s45
      %p47 = scmp.eq.s32.totalorder %s21, 0
      %p48 = por %p46, %p47
      %s49 = ssub.s32 %s15, %s22
      %p50 = scmp.eq.s32.totalorder %s49, 0
      %s52 = sadd.s32 %s51, 1
      %s53 = scalar_select %p50, %s51, %s52
      %p56 = pneg %p50
      %p57 = scmp.eq.s32.totalorder %s15, 3
      %p58 = por %p56, %p57
      %p59 = scmp.ne.s32.totalorder %s51, %s54
      %p60 = scmp.eq.s32.totalorder %s15, 0
      %p61 = por %p59, %p60
      %p62 = scmp.ne.s32.totalorder %s51, %s54
      %p63 = scmp.eq.s32.totalorder %s20, 3
      %p64 = por %p62, %p63
      %p65 = scmp.ne.s32.totalorder %s54, %s55
      %p66 = scmp.eq.s32.totalorder %s20, 0
      %p67 = por %p65, %p66
      %p68 = scmp.ne.s32.totalorder %s54, %s55
      %p69 = scmp.eq.s32.totalorder %s21, 3
      %p70 = por %p68, %p69
      %p72 = scmp.ne.s32.totalorder %s55, %s71
      %p73 = scmp.eq.s32.totalorder %s21, 0
      %p74 = por %p72, %p73
      %s76 = sadd.s32 %s75, 1
      %p79 = scmp.eq.s32.totalorder %s15, 3
      %p80 = scmp.ne.s32.totalorder %s75, %s77
      %p81 = scmp.eq.s32.totalorder %s15, 0
      %p82 = por %p80, %p81
      %p83 = scmp.ne.s32.totalorder %s75, %s77
      %p84 = scmp.eq.s32.totalorder %s20, 3
      %p85 = por %p83, %p84
      %p86 = scmp.ne.s32.totalorder %s77, %s78
      %p87 = scmp.eq.s32.totalorder %s20, 0
      %p88 = por %p86, %p87
      %p89 = scmp.ne.s32.totalorder %s77, %s78
      %p90 = scmp.eq.s32.totalorder %s21, 3
      %p91 = por %p89, %p90
      %p93 = scmp.ne.s32.totalorder %s78, %s92
      %p94 = scmp.eq.s32.totalorder %s21, 0
      %p95 = por %p93, %p94
      %s97 = sadd.s32 %s96, 1
      %p100 = scmp.eq.s32.totalorder %s15, 3
      %p101 = scmp.ne.s32.totalorder %s96, %s98
      %p102 = scmp.eq.s32.totalorder %s15, 0
      %p103 = por %p101, %p102
      %p104 = scmp.ne.s32.totalorder %s96, %s98
      %p105 = scmp.eq.s32.totalorder %s20, 3
      %p106 = por %p104, %p105
      %p107 = scmp.ne.s32.totalorder %s98, %s99
      %p108 = scmp.eq.s32.totalorder %s20, 0
      %p109 = por %p107, %p108
      %p110 = scmp.ne.s32.totalorder %s98, %s99
      %p111 = scmp.eq.s32.totalorder %s21, 3
      %p112 = por %p110, %p111
      %p114 = scmp.ne.s32.totalorder %s99, %s113
      %p115 = scmp.eq.s32.totalorder %s21, 0
      %p116 = por %p114, %p115
      %s118 = sadd.s32 %s117, 1
      %p121 = scmp.eq.s32.totalorder %s15, 3
      %p122 = scmp.ne.s32.totalorder %s117, %s119
      %p123 = scmp.eq.s32.totalorder %s15, 0
      %p124 = por %p122, %p123
      %p125 = scmp.ne.s32.totalorder %s117, %s119
      %p126 = scmp.eq.s32.totalorder %s20, 3
      %p127 = por %p125, %p126
      %p128 = scmp.ne.s32.totalorder %s119, %s120
      %p129 = scmp.eq.s32.totalorder %s20, 0
      %p130 = por %p128, %p129
      %p131 = scmp.ne.s32.totalorder %s119, %s120
      %p132 = scmp.eq.s32.totalorder %s21, 3
      %p133 = por %p131, %p132
      %p135 = scmp.ne.s32.totalorder %s120, %s134
      %p136 = scmp.eq.s32.totalorder %s21, 0
      %p137 = por %p135, %p136
      %s138 = ssub.s32 %s15, %s22
      %p139 = scmp.eq.s32.totalorder %s138, 0
      %s141 = sadd.s32 %s140, 1
      %s142 = scalar_select %p139, %s140, %s141
      %p145 = pneg %p139
      %p146 = scmp.eq.s32.totalorder %s15, 3
      %p147 = por %p145, %p146
      %p148 = scmp.ne.s32.totalorder %s140, %s143
      %p149 = scmp.eq.s32.totalorder %s15, 0
      %p150 = por %p148, %p149
      %p151 = scmp.ne.s32.totalorder %s140, %s143
      %p152 = scmp.eq.s32.totalorder %s20, 3
      %p153 = por %p151, %p152
      %p154 = scmp.ne.s32.totalorder %s143, %s144
      %p155 = scmp.eq.s32.totalorder %s20, 0
      %p156 = por %p154, %p155
      %p157 = scmp.ne.s32.totalorder %s143, %s144
      %p158 = scmp.eq.s32.totalorder %s21, 3
      %p159 = por %p157, %p158
      %p161 = scmp.ne.s32.totalorder %s144, %s160
      %p162 = scmp.eq.s32.totalorder %s21, 0
      %p163 = por %p161, %p162
      %p164 = scmp.le.s32.totalorder 1, %s15
      %p165 = scmp.lt.s32.totalorder %s15, 5
      %p166 = pnand %p164, %p165
      %p167 = pneg %p166
      // Predicated region
      $region9: #{text_pc_matrix_embedding.1} parent=5 // pred_check
        _
      $region10: #{text_pc_matrix_embedding.1} parent=5 // pred_check_branch
        %169 = sbr.rel (%p166) target = $region12
      $region11: #{text_pc_matrix_embedding.1} parent=5 // pred_region
        %s170 = ssub.s32 %s15, 1
        // Predicated region
        $region13: #{text_pc_matrix_embedding.1} parent=11 // pred_check
          %p171 = pneg %p88
        $region14: #{text_pc_matrix_embedding.1} parent=11 // pred_check_branch
          %173 = sbr.rel (%p171) target = $region16
        $region15: #{text_pc_matrix_embedding.1} parent=11 // pred_region
          %s175 = ssub.s32 1024, 1024
          %176 = vsyncadd [#allocation3], %s175
          %s177 = sshll.u32 [#allocation2], 4
          %s178 = int_to_ptr.vmem [resolvable:$true] %s177
          %183 = dma.hbm_to_vmem [thread:$0]  %s2, 1024, %s178, [#allocation3], 128, 128, 8
        $region16: #{text_pc_matrix_embedding.1} parent=11 // pred_fallthru
          _
        // Predicated region
        $region17: #{text_pc_matrix_embedding.1} parent=11 // pred_check
          %p184 = pneg %p109
        $region18: #{text_pc_matrix_embedding.1} parent=11 // pred_check_branch
          %186 = sbr.rel (%p184) target = $region20
        $region19: #{text_pc_matrix_embedding.1} parent=11 // pred_region
          _
        $region20: #{text_pc_matrix_embedding.1} parent=11 // pred_fallthru
          _
        // Predicated region
        $region21: #{text_pc_matrix_embedding.1} parent=11 // pred_check
          %p187 = pneg %p130
        $region22: #{text_pc_matrix_embedding.1} parent=11 // pred_check_branch
          %189 = sbr.rel (%p187) target = $region24
        $region23: #{text_pc_matrix_embedding.1} parent=11 // pred_region
          _
        $region24: #{text_pc_matrix_embedding.1} parent=11 // pred_fallthru
          _
      $region12: #{text_pc_matrix_embedding.1} parent=5 // pred_fallthru
        _
      %p190 = scmp.lt.s32.totalorder %s15, 4
      // Predicated region
      $region25: #{text_pc_matrix_embedding.1} parent=5 // pred_check
        %p191 = pneg %p190
      $region26: #{text_pc_matrix_embedding.1} parent=5 // pred_check_branch
        %193 = sbr.rel (%p191) target = $region28
      $region27: #{text_pc_matrix_embedding.1} parent=5 // pred_region
        // Predicated region
        $region29: #{text_pc_matrix_embedding.1} parent=27 // pred_check
          %p194 = pneg %p35
        $region30: #{text_pc_matrix_embedding.1} parent=27 // pred_check_branch
          %196 = sbr.rel (%p194) target = $region32
        $region31: #{text_pc_matrix_embedding.1} parent=27 // pred_region
          %s197 = smul.u32 2, %s15
          %p198 = scmp.lt.s32.totalorder %s197, 7
          %s199 = scalar_select %p198, %s197, 7
          %s200 = smul.addr %s199, 8
          %s201 = scalar_lea.vmem %s0, %s200
          %s202 = smul.u32 2, %s15
        $region32: #{text_pc_matrix_embedding.1} parent=27 // pred_fallthru
          _
        // Predicated region
        $region33: #{text_pc_matrix_embedding.1} parent=27 // pred_check
          %p203 = pneg %p61
        $region34: #{text_pc_matrix_embedding.1} parent=27 // pred_check_branch
          %205 = sbr.rel (%p203) target = $region36
        $region35: #{text_pc_matrix_embedding.1} parent=27 // pred_region
          %s206 = smul.u32 2, %s15
          %p207 = scmp.lt.s32.totalorder %s206, 7
          %s208 = scalar_select %p207, %s206, 7
          %s209 = smul.addr %s208, 8
          %s210 = scalar_lea.vmem %s1, %s209
          %s211 = smul.u32 2, %s15
        $region36: #{text_pc_matrix_embedding.1} parent=27 // pred_fallthru
          _
      $region28: #{text_pc_matrix_embedding.1} parent=5 // pred_fallthru
        _
      %p212 = scmp.le.s32.totalorder 1, %s15
      %p213 = scmp.lt.s32.totalorder %s15, 5
      %p214 = pnand %p212, %p213
      %p215 = pneg %p214
      // Predicated region
      $region37: #{text_pc_matrix_embedding.1} parent=5 // pred_check
        _
      $region38: #{text_pc_matrix_embedding.1} parent=5 // pred_check_branch
        %217 = sbr.rel (%p214) target = $region40
      $region39: #{text_pc_matrix_embedding.1} parent=5 // pred_region
        %s218 = ssub.s32 %s15, 1
        // Predicated region
        $region41: #{text_pc_matrix_embedding.1} parent=39 // pred_check
          %p219 = pneg %p88
        $region42: #{text_pc_matrix_embedding.1} parent=39 // pred_check_branch
          %221 = sbr.rel (%p219) target = $region44
        $region43: #{text_pc_matrix_embedding.1} parent=39 // pred_region
          %222 = dma.done [#allocation3], 1024
        $region44: #{text_pc_matrix_embedding.1} parent=39 // pred_fallthru
          _
        %s223 = smul.u32 2, %s20
        %p224 = scmp.lt.s32.totalorder %s223, 7
        %s225 = scalar_select %p224, %s223, 7
        %s226 = smul.addr %s225, 8
        %s227 = scalar_lea.vmem %s0, %s226
        %p228 = pneg %p41
        %p229 = pneg %p38
        %s230 = smul.u32 2, %s20
        %p231 = scmp.lt.s32.totalorder %s230, 7
        %s232 = scalar_select %p231, %s230, 7
        %s233 = smul.addr %s232, 8
        %s234 = scalar_lea.vmem %s1, %s233
        %p235 = pneg %p67
        %p236 = pneg %p64
        %p237 = pneg %p88
        %p238 = pneg %p85
        %p239 = pneg %p109
        %p240 = pneg %p106
        %p241 = pneg %p130
        %p242 = pneg %p127
        %p243 = pneg %p156
        %p244 = pneg %p153
        %s245 = sand.u32 %s143, 1
        %s246 = scalar_lea.sflag [#allocation4], %s245
        %s247 = sand.u32 %s143, 1
        %s248 = smul.addr %s247, 16
        %s249 = scalar_lea.vmem [#allocation5], %s248
        %s250 = smul.u32 2, %s20
        %p251 = scmp.lt.s32.totalorder %s250, 7
        %s252 = scalar_select %p251, %s250, 7
        %s253 = smul.addr %s252, 8
        %s254 = scalar_lea.vmem %s0, %s253
        %s255 = smul.u32 2, %s20
        %s256 = smul.u32 2, %s20
        %p257 = scmp.lt.s32.totalorder %s256, 7
        %s258 = scalar_select %p257, %s256, 7
        %s259 = smul.addr %s258, 8
        %s260 = scalar_lea.vmem %s1, %s259
        %s261 = smul.u32 2, %s20
        %s262 = smul.u32 2, %s20
        %v263 = vld [vmem:[%s254] sm:$0xff]
        %v264 = vld [vmem:[%s254 + $0x8] sm:$0xff]
        %v265 = vld [vmem:[#allocation2] sm:$0xff]
        %v266 = vld [vmem:[#allocation2 + $0x8] sm:$0xff]
        %v267 = vld [vmem:[#allocation2 + $0x10] sm:$0xff]
        %v268 = vld [vmem:[#allocation2 + $0x18] sm:$0xff]
        %v269 = vld [vmem:[#allocation2 + $0x20] sm:$0xff]
        %v270 = vld [vmem:[#allocation2 + $0x28] sm:$0xff]
        %v271 = vld [vmem:[#allocation2 + $0x30] sm:$0xff]
        %v272 = vld [vmem:[#allocation2 + $0x38] sm:$0xff]
        %v273 = vld [vmem:[%s260] sm:$0xff]
        %v274 = vld [vmem:[%s260 + $0x8] sm:$0xff]
        %v275 = vld [vmem:[%s3] sm:$0xff]
        %v276 = vld [vmem:[%s3 + $0x8] sm:$0xff]
        %v277 = vld [vmem:[%s3 + $0x10] sm:$0xff]
        %v278 = vld [vmem:[%s3 + $0x18] sm:$0xff]
        %vm279 = vcmask 261120
        %v281 = vsel %vm279, %v273, 0
        %v284 = vsel %vm279, %v274, 0
        %286 = vmatprep.subr.mxu0 0.0
        %287 = vmatpush1.msra.mxu0 %v275
        %288 = vmatprep.subr.mxu0 0.0
        %289 = vmatpush1.msra.mxu0 %v276
        %290 = vmatprep.subr.mxu0 0.0
        %291 = vmatpush1.msra.mxu0 %v277
        %292 = vmatprep.subr.mxu0 0.0
        %293 = vmatpush1.msra.mxu0 %v278
        %294 = vmatprep.subr.mxu0 0.0
        %295 = vmatpush1.msra.mxu0 0.0
        %296 = vmatprep.subr.mxu0 0.0
        %297 = vmatpush1.msra.mxu0 0.0
        %298 = vmatprep.subr.mxu0 0.0
        %299 = vmatpush1.msra.mxu0 0.0
        %300 = vmatprep.subr.mxu0 0.0
        %301 = vmatpush1.msra.mxu0 0.0
        %302 = vmatprep.subr.mxu0 0.0
        %303 = vmatpush1.msra.mxu0 0.0
        %304 = vmatprep.subr.mxu0 0.0
        %305 = vmatpush1.msra.mxu0 0.0
        %306 = vmatprep.subr.mxu0 0.0
        %307 = vmatpush1.msra.mxu0 0.0
        %308 = vmatprep.subr.mxu0 0.0
        %309 = vmatpush1.msra.mxu0 0.0
        %310 = vmatprep.subr.mxu0 0.0
        %311 = vmatpush1.msra.mxu0 0.0
        %312 = vmatprep.subr.mxu0 0.0
        %313 = vmatpush1.msra.mxu0 0.0
        %314 = vmatprep.subr.mxu0 0.0
        %315 = vmatpush1.msra.mxu0 0.0
        %316 = vmatprep.subr.mxu0 0.0
        %317 = vmatpush1.msra.mxu0 0.0
        %318 = vmatprep.subr.mxu0 0.0
        %319 = vmatpush1.msra.mxu0 0.0
        %320 = vmatprep.subr.mxu0 0.0
        %321 = vmatpush1.msra.mxu0 0.0
        %322 = vmatprep.subr.mxu0 0.0
        %323 = vmatpush1.msra.mxu0 0.0
        %324 = vmatprep.subr.mxu0 0.0
        %325 = vmatpush1.msra.mxu0 0.0
        %326 = vmatprep.subr.mxu0 0.0
        %327 = vmatpush1.msra.mxu0 0.0
        %328 = vmatprep.subr.mxu0 0.0
        %329 = vmatpush1.msra.mxu0 0.0
        %330 = vmatprep.subr.mxu0 0.0
        %331 = vmatpush1.msra.mxu0 0.0
        %332 = vmatprep.subr.mxu0 0.0
        %333 = vmatpush1.msra.mxu0 0.0
        %334 = vmatprep.subr.mxu0 0.0
        %335 = vmatpush1.msra.mxu0 0.0
        %336 = vmatprep.subr.mxu0 0.0
        %337 = vmatpush1.msra.mxu0 0.0
        %338 = vmatprep.subr.mxu0 0.0
        %339 = vmatpush1.msra.mxu0 0.0
        %340 = vmatprep.subr.mxu0 0.0
        %341 = vmatpush1.msra.mxu0 0.0
        %342 = vmatprep.subr.mxu0 0.0
        %343 = vmatpush1.msra.mxu0 0.0
        %344 = vmatprep.subr.mxu0 0.0
        %345 = vmatpush1.msra.mxu0 0.0
        %346 = vmatprep.subr.mxu0 0.0
        %347 = vmatpush1.msra.mxu0 0.0
        %348 = vmatprep.subr.mxu0 0.0
        %349 = vmatpush1.msra.mxu0 0.0
        %350 = vmatprep.mubr.f32.mxu0 0.0
        %351 = vmatmul.mubr.f32.gmra.mrb[0].mxu0 %v281
        %v352 = vpop.f32.mrb[0].mxu0
        %v353 = vadd.f32 0.0, %v352
        %v354 = vpop.f32.mrb[0].mxu0
        %355 = vmatprep.mubr.f32.mxu0 0.0
        %356 = vmatmul.mubr.f32.gmra.mrb[0].mxu0 %v284
        %v357 = vpop.f32.mrb[0].mxu0
        %v358 = vadd.f32 0.0, %v357
        %v359 = vpop.f32.mrb[0].mxu0
        %360 = vdwg.mxu0
        %vm361 = vcmask 523264
        %v363 = vsel %vm361, %v263, 0
        %v366 = vsel %vm361, %v264, 0
        %368 = vmatprep.subr.mxu0 0.0
        %369 = vmatpush1.msra.mxu0 %v265
        %370 = vmatprep.subr.mxu0 0.0
        %371 = vmatpush1.msra.mxu0 %v266
        %372 = vmatprep.subr.mxu0 0.0
        %373 = vmatpush1.msra.mxu0 %v267
        %374 = vmatprep.subr.mxu0 0.0
        %375 = vmatpush1.msra.mxu0 %v268
        %376 = vmatprep.subr.mxu0 0.0
        %377 = vmatpush1.msra.mxu0 %v269
        %378 = vmatprep.subr.mxu0 0.0
        %379 = vmatpush1.msra.mxu0 %v270
        %380 = vmatprep.subr.mxu0 0.0
        %381 = vmatpush1.msra.mxu0 %v271
        %382 = vmatprep.subr.mxu0 0.0
        %383 = vmatpush1.msra.mxu0 %v272
        %384 = vmatprep.subr.mxu0 0.0
        %385 = vmatpush1.msra.mxu0 0.0
        %386 = vmatprep.subr.mxu0 0.0
        %387 = vmatpush1.msra.mxu0 0.0
        %388 = vmatprep.subr.mxu0 0.0
        %389 = vmatpush1.msra.mxu0 0.0
        %390 = vmatprep.subr.mxu0 0.0
        %391 = vmatpush1.msra.mxu0 0.0
        %392 = vmatprep.subr.mxu0 0.0
        %393 = vmatpush1.msra.mxu0 0.0
        %394 = vmatprep.subr.mxu0 0.0
        %395 = vmatpush1.msra.mxu0 0.0
        %396 = vmatprep.subr.mxu0 0.0
        %397 = vmatpush1.msra.mxu0 0.0
        %398 = vmatprep.subr.mxu0 0.0
        %399 = vmatpush1.msra.mxu0 0.0
        %400 = vmatprep.subr.mxu0 0.0
        %401 = vmatpush1.msra.mxu0 0.0
        %402 = vmatprep.subr.mxu0 0.0
        %403 = vmatpush1.msra.mxu0 0.0
        %404 = vmatprep.subr.mxu0 0.0
        %405 = vmatpush1.msra.mxu0 0.0
        %406 = vmatprep.subr.mxu0 0.0
        %407 = vmatpush1.msra.mxu0 0.0
        %408 = vmatprep.subr.mxu0 0.0
        %409 = vmatpush1.msra.mxu0 0.0
        %410 = vmatprep.subr.mxu0 0.0
        %411 = vmatpush1.msra.mxu0 0.0
        %412 = vmatprep.subr.mxu0 0.0
        %413 = vmatpush1.msra.mxu0 0.0
        %414 = vmatprep.subr.mxu0 0.0
        %415 = vmatpush1.msra.mxu0 0.0
        %416 = vmatprep.subr.mxu0 0.0
        %417 = vmatpush1.msra.mxu0 0.0
        %418 = vmatprep.subr.mxu0 0.0
        %419 = vmatpush1.msra.mxu0 0.0
        %420 = vmatprep.subr.mxu0 0.0
        %421 = vmatpush1.msra.mxu0 0.0
        %422 = vmatprep.subr.mxu0 0.0
        %423 = vmatpush1.msra.mxu0 0.0
        %424 = vmatprep.subr.mxu0 0.0
        %425 = vmatpush1.msra.mxu0 0.0
        %426 = vmatprep.subr.mxu0 0.0
        %427 = vmatpush1.msra.mxu0 0.0
        %428 = vmatprep.subr.mxu0 0.0
        %429 = vmatpush1.msra.mxu0 0.0
        %430 = vmatprep.subr.mxu0 0.0
        %431 = vmatpush1.msra.mxu0 0.0
        %432 = vmatprep.mubr.f32.mxu0 0.0
        %433 = vmatmul.mubr.f32.gmra.mrb[0].mxu0 %v363
        %v434 = vpop.f32.mrb[0].mxu0
        %v435 = vadd.f32 %v353, %v434
        %v436 = vpop.f32.mrb[0].mxu0
        %437 = vmatprep.mubr.f32.mxu0 0.0
        %438 = vmatmul.mubr.f32.gmra.mrb[0].mxu0 %v366
        %v439 = vpop.f32.mrb[0].mxu0
        %v440 = vadd.f32 %v358, %v439
        %v441 = vpop.f32.mrb[0].mxu0
        %442 = vdwg.mxu0
        %v443 = vld [vmem:[%s4] sm:$0x1]
        %v445 = vlaneseq
        %v446 = vshrl.u32 %v445, 7
        %v447 = vsub.s32 0, %v446
        %v448 = vrot.slane %v443, %v447
        %v450 = vadd.f32 %v435, %v448
        %v451 = vadd.f32 %v440, %v448
        %452 = vst [vmem:[%s249] sm:$0xff] %v450
        %453 = vst [vmem:[%s249 + $0x8] sm:$0xff] %v451
        %s454 = sand.u32 %s143, 1
        %s455 = scalar_lea.sflag [#allocation4], %s454
        %s456 = sand.u32 %s143, 1
        %s457 = smul.addr %s456, 16
        %s458 = scalar_lea.vmem [#allocation5], %s457
        // Predicated region
        $region45: #{text_pc_matrix_embedding.1} parent=39 // pred_check
          %p459 = pneg %p153
        $region46: #{text_pc_matrix_embedding.1} parent=39 // pred_check_branch
          %461 = sbr.rel (%p459) target = $region48
        $region47: #{text_pc_matrix_embedding.1} parent=39 // pred_region
          %s462 = smul.u32 2, %s20
          %s464 = ssub.s32 256, 256
          %465 = vsyncadd %s455, %s464
          %s466 = smul.addr %s462, 128
          %s467 = scalar_lea.hbm %s5, %s466
          %s468 = sshll.u32 %s458, 4
          %s469 = int_to_ptr.vmem [resolvable:$true] %s468
          %474 = dma.vmem_to_hbm [thread:$0]  %s469, 256, %s467, %s455, 128, 128, 8
        $region48: #{text_pc_matrix_embedding.1} parent=39 // pred_fallthru
          _
      $region40: #{text_pc_matrix_embedding.1} parent=5 // pred_fallthru
        _
      %p475 = scmp.le.s32.totalorder 2, %s15
      // Predicated region
      $region49: #{text_pc_matrix_embedding.1} parent=5 // pred_check
        %p476 = pneg %p475
      $region50: #{text_pc_matrix_embedding.1} parent=5 // pred_check_branch
        %478 = sbr.rel (%p476) target = $region52
      $region51: #{text_pc_matrix_embedding.1} parent=5 // pred_region
        %s479 = ssub.s32 %s15, 2
        // Predicated region
        $region53: #{text_pc_matrix_embedding.1} parent=51 // pred_check
          %p480 = pneg %p159
        $region54: #{text_pc_matrix_embedding.1} parent=51 // pred_check_branch
          %482 = sbr.rel (%p480) target = $region56
        $region55: #{text_pc_matrix_embedding.1} parent=51 // pred_region
          %s483 = sand.u32 %s144, 1
          %s484 = scalar_lea.sflag [#allocation4], %s483
          %s485 = sand.u32 %s144, 1
          %s486 = smul.addr %s485, 16
          %s487 = scalar_lea.vmem [#allocation5], %s486
          %488 = dma.done %s484, 256
        $region56: #{text_pc_matrix_embedding.1} parent=51 // pred_fallthru
          _
      $region52: #{text_pc_matrix_embedding.1} parent=5 // pred_fallthru
        _
    $region6: #{text_pc_matrix_embedding.1} parent=1 // loop_footer
      %s19 = sadd.s32 1, %s15
    $region7: #{text_pc_matrix_embedding.1} parent=1 // loop_footer_branch
      %14 = sbr.rel target = $region3
    $region8: #{text_pc_matrix_embedding.1} parent=1 // loop_exit
      _
    %489 = vsyncpa [#allocation3], 1
    %s490 = scalar_lea.sflag [#allocation3], 1
    %491 = vsyncpa %s490, 1
    %492 = vsyncpa [#allocation4], 1
    %s493 = scalar_lea.sflag [#allocation4], 1
    %494 = vsyncpa %s493, 1

</llo_original>
